<compile_context>
chip_gen: v5e
topology: v5e:2x2
jax: 0.10.0
libtpu: 0.0.40
codegen_flags: <defaults>
</compile_context>

<pallas_src>
import functools

import jax
import jax.numpy as jnp
from jax import lax
from jax.experimental import pallas as pl
from jax.experimental.pallas import tpu as pltpu

_LANE = 128


def _round_up(x, m):
    return (x + m - 1) // m * m


def _device_kind():
    try:
        return jax.devices()[0].device_kind.lower()
    except Exception:
        return ""


def _vmem_capacity_bytes():
    try:
        return int(pltpu.get_tpu_info().vmem_capacity_bytes)
    except Exception:
        # v7x: 64 MiB VMEM per TensorCore; v5e/v6e: 128 MiB.
        return (64 << 20) if "v7" in _device_kind() else (128 << 20)


def _mxu_oc_tile():
    # v5e/v5p MXUs are 128 wide -> 128-wide output tiles map natively.
    # v6e/v7x MXUs are 2x256x256 -> use 256 so the systolic width isn't half idle.
    return _LANE if "v5" in _device_kind() else 256


# ----------------------------- Pallas kernel --------------------------------
def _conv_gemm_kernel(p_ref, w_ref, b_ref, o_ref):
    """One MXU GEMM tile of the im2col'd strided conv.

    p_ref: (TM, Kp)   patches tile (3x3 taps folded into the K dim).
    w_ref: (Kp, TOC)  weight tile.
    b_ref: (1, TOC)   f32 bias tile.
    o_ref: (TM, TOC)  output tile (lane-dense last dim).

    K is fully resident (no reduction grid axis), so each grid step produces
    its whole output tile with a single matmul + bias add — no accumulator
    scratch, no in-kernel relayouts.
    """
    acc = jnp.dot(p_ref[...], w_ref[...], preferred_element_type=jnp.float32)
    o_ref[...] = (acc + b_ref[...]).astype(o_ref.dtype)


# ------------------------------ wrapper --------------------------------------
@functools.partial(jax.jit, static_argnames=("compute_dtype",))
def downsample_conv(x, weight, bias, *, compute_dtype=jnp.bfloat16):
    """Strided 3x3 conv, stride=2, padding=1 (PyTorch Conv2d semantics).

    x:      (N, C, H, W)
    weight: (OC, C, 3, 3)  PyTorch OIHW
    bias:   (OC,)
    returns (N, OC, OH, OW), OH = (H + 2 - 3)//2 + 1 (same for OW).
    """
    N, C, H, W = x.shape
    OC = weight.shape[0]
    KH = KW = 3
    OH = (H + 2 - KH) // 2 + 1
    OW = (W + 2 - KW) // 2 + 1
    M = OH * OW
    K = KH * KW * C

    out_dtype = x.dtype
    in_b = jnp.dtype(compute_dtype).itemsize
    out_b = jnp.dtype(out_dtype).itemsize

    Kp = _round_up(K, _LANE)
    OCp = _round_up(OC, _LANE)

    # ---- per-chip tiling -----------------------------------------------------
    budget = int(0.75 * _vmem_capacity_bytes())   # ~48 MiB on v7x, ~96 MiB on v5e/v6e

    def footprint(tm, toc):
        # Honest accounting: Pallas double-buffers every BlockSpec operand.
        return (2 * tm * Kp * in_b            # patches tile
                + 2 * Kp * toc * in_b         # weight tile
                + 2 * toc * 4                 # bias tile (f32)
                + 2 * tm * toc * out_b)       # output tile

    def pick_tm(toc):
        m8 = max(8, _round_up(M, 8))
        cands = {8, 16, 32, 64, 128, 256, 512}
        for div in (1, 2, 4, 8, 16, 32, 64):
            cands.add(max(8, _round_up(-(-M // div), 8)))
        cands = {min(c, m8) for c in cands}            # never bigger than the data
        for tm in sorted(cands, reverse=True):
            if tm <= 2048 and footprint(tm, toc) <= budget:
                return tm
        return 8

    # Prefer the weight fully VMEM-resident: constant index_map -> read from
    # HBM exactly once for the whole kernel.
    TOC = OCp
    TM = pick_tm(TOC)
    if footprint(TM, TOC) > budget:
        # Weight too large to keep resident (e.g. the 1280->1280 SD layer on
        # v7x's 64 MiB VMEM): stream it in MXU-native OC tiles instead.
        TOC = min(_mxu_oc_tile(), OCp)
        OCp = _round_up(OC, TOC)
        TM = pick_tm(TOC)
    # TODO(synk): add a K (reduction) grid axis + f32 accumulator scratch if
    # 9*C ever grows too large for a single (8, Kp) x (Kp, TOC) block.

    Mp = _round_up(M, TM)
    MT, JT = Mp // TM, OCp // TOC
    grid = (N, MT, JT)

    # ---- layout plumbing (pure XLA): NCHW->NHWC, pad, stride-2 im2col --------
    x_nhwc = jnp.transpose(x, (0, 2, 3, 1)).astype(compute_dtype)
    Hp, Wp = 2 * OH + 1, 2 * OW + 1            # only rows/cols any tap touches
    xp = jnp.pad(x_nhwc, ((0, 0), (1, Hp - 1 - H), (1, Wp - 1 - W), (0, 0)))
    # Tap (kh, kw) of output (oh, ow) reads xp[2*oh + kh, 2*ow + kw].
    taps = [xp[:, kh:kh + 2 * OH:2, kw:kw + 2 * OW:2, :]
            for kh in range(KH) for kw in range(KW)]        # 9 x (N, OH, OW, C)
    patches = jnp.concatenate(taps, axis=-1).reshape(N, M, K)   # k = tap*C + c
    patches = jnp.pad(patches, ((0, 0), (0, Mp - M), (0, Kp - K)))

    # Weight OIHW -> (k, oc), k = (kh*3 + kw)*C + c (matches the patches order).
    w2 = jnp.transpose(weight, (2, 3, 1, 0)).reshape(K, OC)
    w2 = jnp.pad(w2, ((0, Kp - K), (0, OCp - OC))).astype(compute_dtype)
    b2 = jnp.pad(bias.astype(jnp.float32), (0, OCp - OC)).reshape(1, OCp)

    # ---- pallas_call ----------------------------------------------------------
    block_bytes = footprint(TM, TOC)
    vmem_limit = int(max(32 << 20, min(budget, block_bytes + (4 << 20))))

    w_reads = 1 if JT == 1 else N * MT   # resident: read once; tiled: re-streamed
    flops = 2 * N * Mp * Kp * OCp
    bytes_accessed = (N * Mp * Kp * in_b
                      + w_reads * Kp * OCp * in_b
                      + OCp * 4
                      + N * Mp * OCp * out_b)

    out2d = pl.pallas_call(
        _conv_gemm_kernel,
        out_shape=jax.ShapeDtypeStruct((N, Mp, OCp), out_dtype),
        grid=grid,
        in_specs=[
            pl.BlockSpec((None, TM, Kp), lambda n, mi, j: (n, mi, 0)),  # patches
            pl.BlockSpec((Kp, TOC), lambda n, mi, j: (0, j)),           # weight
            pl.BlockSpec((1, TOC), lambda n, mi, j: (0, j)),            # bias
        ],
        out_specs=pl.BlockSpec((None, TM, TOC), lambda n, mi, j: (n, mi, j)),
        compiler_params=pltpu.CompilerParams(
            dimension_semantics=("parallel", "parallel", "parallel"),
            vmem_limit_bytes=vmem_limit),
        cost_estimate=pl.CostEstimate(flops=flops, transcendentals=0,
                                      bytes_accessed=bytes_accessed),
    )(patches, w2, b2)

    # ---- back to NCHW, drop M / OC padding ------------------------------------
    out = out2d[:, :M, :OC].reshape(N, OH, OW, OC).transpose(0, 3, 1, 2)
    return out


# ------------------------------ main -----------------------------------------
if __name__ == "__main__":
    key = jax.random.PRNGKey(0)
    k_x, k_w, k_b = jax.random.split(key, 3)

    N, C, H, W = 2, 4, 16, 16
    OC = C  # Downsample default: out_channels = channels

    x = jax.random.normal(k_x, (N, C, H, W), dtype=jnp.float32)

    # Deterministic Conv2d-style init (uniform in +-1/sqrt(fan_in)).
    fan_in = C * 3 * 3
    bound = 1.0 / (fan_in ** 0.5)
    weight = jax.random.uniform(k_w, (OC, C, 3, 3), jnp.float32, -bound, bound)
    bias = jax.random.uniform(k_b, (OC,), jnp.float32, -bound, bound)

    def xla_ref(xv, wv):
        return lax.conv_general_dilated(
            xv, wv, window_strides=(2, 2), padding=((1, 1), (1, 1)),
            dimension_numbers=("NCHW", "OIHW", "NCHW"),
        ) + bias.reshape(1, OC, 1, 1)

    OH, OW = H // 2, W // 2

    # 1) f32 compute path: exact semantics of the PyTorch module.
    out_f32 = jax.block_until_ready(
        downsample_conv(x, weight, bias, compute_dtype=jnp.float32))
    ref_f32 = xla_ref(x, weight)
    assert out_f32.shape == (N, OC, OH, OW), out_f32.shape
    assert jnp.allclose(out_f32, ref_f32, atol=1e-5, rtol=1e-5), \
        float(jnp.max(jnp.abs(out_f32 - ref_f32)))

    # 2) bf16-MXU path (default; f32 accumulation).  Compare against a
    #    reference fed the same bf16-rounded inputs so only the f32
    #    accumulation order differs.
    out_bf16 = jax.block_until_ready(downsample_conv(x, weight, bias))
    xq = x.astype(jnp.bfloat16).astype(jnp.float32)
    wq = weight.astype(jnp.bfloat16).astype(jnp.float32)
    ref_bf16 = xla_ref(xq, wq)
    assert out_bf16.shape == (N, OC, OH, OW), out_bf16.shape
    assert jnp.allclose(out_bf16, ref_bf16, atol=1e-4, rtol=1e-4), \
        float(jnp.max(jnp.abs(out_bf16 - ref_bf16)))

    print("KERNEL_OK")
</pallas_src>

<mosaic_0001>
module attributes {stable_mosaic.version = 11 : i64} {
  func.func @_conv_gemm_kernel(%arg0: i32, %arg1: i32, %arg2: i32, %arg3: memref<1x64x128xf32, #tpu.memory_space<vmem>>, %arg4: memref<128x128xf32, #tpu.memory_space<vmem>>, %arg5: memref<1x128xf32, #tpu.memory_space<vmem>>, %arg6: memref<1x64x128xf32, #tpu.memory_space<vmem>>) attributes {dimension_semantics = [#tpu.dimension_semantics<parallel>, #tpu.dimension_semantics<parallel>, #tpu.dimension_semantics<parallel>], iteration_bounds = array<i64: 2, 1, 1>, scalar_prefetch = 0 : i64, scratch_operands = 0 : i64, tpu.core_type = #tpu.core_type<tc>, window_params = [{transform_indices = @transform_0, window_bounds = array<i64: 1, 64, 128>}, {transform_indices = @transform_1, window_bounds = array<i64: 128, 128>}, {transform_indices = @transform_2, window_bounds = array<i64: 1, 128>}, {transform_indices = @transform_3, window_bounds = array<i64: 1, 64, 128>}]} {
    %c0 = arith.constant 0 : index
    %c0_0 = arith.constant 0 : index
    %c0_1 = arith.constant 0 : index
    %0 = vector.load %arg3[%c0, %c0_0, %c0_1] : memref<1x64x128xf32, #tpu.memory_space<vmem>>, vector<1x64x128xf32>
    %1 = vector.shape_cast %0 : vector<1x64x128xf32> to vector<64x128xf32>
    %c0_2 = arith.constant 0 : index
    %c0_3 = arith.constant 0 : index
    %2 = vector.load %arg4[%c0_2, %c0_3] : memref<128x128xf32, #tpu.memory_space<vmem>>, vector<128x128xf32>
    %cst = arith.constant dense<0.000000e+00> : vector<64x128xf32>
    %3 = tpu.matmul %1, %2, %cst {dimension_numbers = #tpu.dot_dimension_numbers<[1], [0], [0], [1], [0, 0, 1, 1], [], []>} : vector<64x128xf32>, vector<128x128xf32>, vector<64x128xf32> -> vector<64x128xf32>
    %c0_4 = arith.constant 0 : index
    %c0_5 = arith.constant 0 : index
    %4 = vector.load %arg5[%c0_4, %c0_5] : memref<1x128xf32, #tpu.memory_space<vmem>>, vector<1x128xf32>
    %5 = vector.broadcast %4 : vector<1x128xf32> to vector<64x128xf32>
    %6 = arith.addf %3, %5 : vector<64x128xf32>
    %c0_6 = arith.constant 0 : index
    %c0_7 = arith.constant 0 : index
    %c0_8 = arith.constant 0 : index
    %7 = vector.load %arg6[%c0_6, %c0_7, %c0_8] : memref<1x64x128xf32, #tpu.memory_space<vmem>>, vector<1x64x128xf32>
    %8 = vector.shape_cast %7 : vector<1x64x128xf32> to vector<64x128xf32>
    %9 = vector.shape_cast %6 : vector<64x128xf32> to vector<1x64x128xf32>
    tpu.vector_store %arg6[%c0_6, %c0_7, %c0_8], %9 {strides = array<i32>} : memref<1x64x128xf32, #tpu.memory_space<vmem>>, vector<1x64x128xf32>,
    return
  }
  func.func @transform_0(%arg0: i32, %arg1: i32, %arg2: i32) -> (i32, i32, i32) {
    %c0_i32 = arith.constant 0 : i32
    %c0_i32_0 = arith.constant 0 : i32
    return %arg0, %arg1, %c0_i32 : i32, i32, i32
  }
  func.func @transform_1(%arg0: i32, %arg1: i32, %arg2: i32) -> (i32, i32) {
    %c0_i32 = arith.constant 0 : i32
    %c0_i32_0 = arith.constant 0 : i32
    return %c0_i32, %arg2 : i32, i32
  }
  func.func @transform_2(%arg0: i32, %arg1: i32, %arg2: i32) -> (i32, i32) {
    %c0_i32 = arith.constant 0 : i32
    %c0_i32_0 = arith.constant 0 : i32
    return %c0_i32, %arg2 : i32, i32
  }
  func.func @transform_3(%arg0: i32, %arg1: i32, %arg2: i32) -> (i32, i32, i32) {
    %c0_i32 = arith.constant 0 : i32
    return %arg0, %arg1, %arg2 : i32, i32, i32
  }
}

</mosaic_0001>

<llo_original>
// kernel: downsample_conv.1
$region0: #{downsample_conv.1}
  #allocation0 [shape = 'u32[]', space=smem, size = 0x4, offset = 0x4, fixed_abs, tag = 'smem constant byte address 0x4 - core index']
  #allocation1 [shape = 'u32[72,128]{1,0:T(1,128)}', space=vmem, size = 0x9000, scoped, tag = 'internal scratch']
  %s0 = inlined_call_operand.vmem [shape: f32[2,64,128], index: 0, kind: input, shape index: {}]
  %s1 = inlined_call_operand.vmem [shape: f32[128,128], index: 1, kind: input, shape index: {}]
  %s2 = inlined_call_operand.vmem [shape: f32[1,128], index: 2, kind: input, shape index: {}]
  %s3 = inlined_call_operand.vmem [shape: f32[2,64,128], index: 3, kind: output, shape index: {}]
  %s4 = sld [smem:[#allocation0]]
  $region45: #{downsample_conv.1} parent=0
    _
  %s6 = ssub.s32 1, %s4
  %s7 = scalar_select 0, %s6, %s4
  loop: start=0, step=1, limit=4
  $region2: #{downsample_conv.1} parent=0 // loop_pre_header
    _
  $region3: #{downsample_conv.1} parent=0 // loop_header
    %s9 = sphi 0, %s13
    %p10 = scmp.ge.s32.totalorder %s9, 4
    %s16 = sphi 0, %s35
    %s17 = sphi 0, %s31
    %s18 = sphi 0, %s27
    %s19 = sphi 0, %s16
    %s20 = sphi 0, %s17
    %s21 = sphi 0, %s18
    %s22 = sphi 0, %s19
    %s23 = sphi 0, %s20
    %s24 = sphi 0, %s21
    %s40 = sphi 0, %s42
    %s43 = sphi 0, %s40
    %s44 = sphi 0, %s43
    %s60 = sphi 0, %s44
    %s66 = sphi 0, %s68
    %s69 = sphi 0, %s66
    %s70 = sphi 0, %s69
    %s86 = sphi 0, %s70
    %s92 = sphi 0, %s94
    %s95 = sphi 0, %s92
    %s96 = sphi 0, %s95
    %s112 = sphi 0, %s96
    %s122 = sphi 0, %s124
    %s125 = sphi 0, %s122
    %s126 = sphi 0, %s125
    %s142 = sphi 0, %s126
  $region4: #{downsample_conv.1} parent=0 // loop_header_branch
    %12 = sbr.rel (%p10) target = $region8
  $region5: #{downsample_conv.1} parent=0 // loop_body
    %s14 = ssub.s32 %s9, 1
    %s15 = ssub.s32 %s9, 2
    %s25 = sadd.s32 1, %s18
    %p26 = scmp.ge.s32.totalorder %s25, 1
    %s27 = scalar_select %p26, 0, %s25
    %s28 = sadd.s32 1, %s17
    %s29 = scalar_select %p26, %s28, %s17
    %p30 = scmp.ge.s32.totalorder %s29, 1
    %s31 = scalar_select %p30, 0, %s29
    %s32 = sadd.s32 1, %s16
    %s33 = scalar_select %p30, %s32, %s16
    %p34 = scmp.ge.s32.totalorder %s33, 2
    %s35 = scalar_select %p34, 0, %s33
    %s36 = ssub.s32 %s16, %s35
    %s37 = ssub.s32 %s17, %s31
    %s38 = sor.u32 %s36, %s37
    %p39 = scmp.eq.s32.totalorder %s38, 0
    %s41 = sadd.s32 %s40, 1
    %s42 = scalar_select %p39, %s40, %s41
    %p45 = pneg %p39
    %p46 = scmp.eq.s32.totalorder %s9, 1
    %p47 = por %p45, %p46
    %p48 = scmp.ne.s32.totalorder %s40, %s43
    %p49 = scmp.eq.s32.totalorder %s9, 0
    %p50 = por %p48, %p49
    %p51 = scmp.ne.s32.totalorder %s40, %s43
    %p52 = scmp.eq.s32.totalorder %s14, 1
    %p53 = por %p51, %p52
    %p54 = scmp.ne.s32.totalorder %s43, %s44
    %p55 = scmp.eq.s32.totalorder %s14, 0
    %p56 = por %p54, %p55
    %p57 = scmp.ne.s32.totalorder %s43, %s44
    %p58 = scmp.eq.s32.totalorder %s15, 1
    %p59 = por %p57, %p58
    %p61 = scmp.ne.s32.totalorder %s44, %s60
    %p62 = scmp.eq.s32.totalorder %s15, 0
    %p63 = por %p61, %p62
    %s64 = ssub.s32 %s18, %s27
    %p65 = scmp.eq.s32.totalorder %s64, 0
    %s67 = sadd.s32 %s66, 1
    %s68 = scalar_select %p65, %s66, %s67
    %p71 = pneg %p65
    %p72 = scmp.eq.s32.totalorder %s9, 1
    %p73 = por %p71, %p72
    %p74 = scmp.ne.s32.totalorder %s66, %s69
    %p75 = scmp.eq.s32.totalorder %s9, 0
    %p76 = por %p74, %p75
    %p77 = scmp.ne.s32.totalorder %s66, %s69
    %p78 = scmp.eq.s32.totalorder %s14, 1
    %p79 = por %p77, %p78
    %p80 = scmp.ne.s32.totalorder %s69, %s70
    %p81 = scmp.eq.s32.totalorder %s14, 0
    %p82 = por %p80, %p81
    %p83 = scmp.ne.s32.totalorder %s69, %s70
    %p84 = scmp.eq.s32.totalorder %s15, 1
    %p85 = por %p83, %p84
    %p87 = scmp.ne.s32.totalorder %s70, %s86
    %p88 = scmp.eq.s32.totalorder %s15, 0
    %p89 = por %p87, %p88
    %s90 = ssub.s32 %s18, %s27
    %p91 = scmp.eq.s32.totalorder %s90, 0
    %s93 = sadd.s32 %s92, 1
    %s94 = scalar_select %p91, %s92, %s93
    %p97 = pneg %p91
    %p98 = scmp.eq.s32.totalorder %s9, 1
    %p99 = por %p97, %p98
    %p100 = scmp.ne.s32.totalorder %s92, %s95
    %p101 = scmp.eq.s32.totalorder %s9, 0
    %p102 = por %p100, %p101
    %p103 = scmp.ne.s32.totalorder %s92, %s95
    %p104 = scmp.eq.s32.totalorder %s14, 1
    %p105 = por %p103, %p104
    %p106 = scmp.ne.s32.totalorder %s95, %s96
    %p107 = scmp.eq.s32.totalorder %s14, 0
    %p108 = por %p106, %p107
    %p109 = scmp.ne.s32.totalorder %s95, %s96
    %p110 = scmp.eq.s32.totalorder %s15, 1
    %p111 = por %p109, %p110
    %p113 = scmp.ne.s32.totalorder %s96, %s112
    %p114 = scmp.eq.s32.totalorder %s15, 0
    %p115 = por %p113, %p114
    %s116 = ssub.s32 %s16, %s35
    %s117 = ssub.s32 %s17, %s31
    %s118 = sor.u32 %s116, %s117
    %s119 = ssub.s32 %s18, %s27
    %s120 = sor.u32 %s118, %s119
    %p121 = scmp.eq.s32.totalorder %s120, 0
    %s123 = sadd.s32 %s122, 1
    %s124 = scalar_select %p121, %s122, %s123
    %p127 = pneg %p121
    %p128 = scmp.eq.s32.totalorder %s9, 1
    %p129 = por %p127, %p128
    %p130 = scmp.ne.s32.totalorder %s122, %s125
    %p131 = scmp.eq.s32.totalorder %s9, 0
    %p132 = por %p130, %p131
    %p133 = scmp.ne.s32.totalorder %s122, %s125
    %p134 = scmp.eq.s32.totalorder %s14, 1
    %p135 = por %p133, %p134
    %p136 = scmp.ne.s32.totalorder %s125, %s126
    %p137 = scmp.eq.s32.totalorder %s14, 0
    %p138 = por %p136, %p137
    %p139 = scmp.ne.s32.totalorder %s125, %s126
    %p140 = scmp.eq.s32.totalorder %s15, 1
    %p141 = por %p139, %p140
    %p143 = scmp.ne.s32.totalorder %s126, %s142
    %p144 = scmp.eq.s32.totalorder %s15, 0
    %p145 = por %p143, %p144
    %p146 = scmp.le.s32.totalorder 1, %s9
    %p147 = scmp.lt.s32.totalorder %s9, 3
    %p148 = pnand %p146, %p147
    %p149 = pneg %p148
    // Predicated region
    $region9: #{downsample_conv.1} parent=5 // pred_check
      _
    $region10: #{downsample_conv.1} parent=5 // pred_check_branch
      %151 = sbr.rel (%p148) target = $region12
    $region11: #{downsample_conv.1} parent=5 // pred_region
      %s152 = ssub.s32 %s9, 1
      // Predicated region
      $region13: #{downsample_conv.1} parent=11 // pred_check
        %p153 = pneg %p82
      $region14: #{downsample_conv.1} parent=11 // pred_check_branch
        %155 = sbr.rel (%p153) target = $region16
      $region15: #{downsample_conv.1} parent=11 // pred_region
        %p156 = scmp.lt.s32.totalorder %s21, 0
        %s157 = scalar_select %p156, %s21, 0
        %s158 = smul.addr %s157, 8
        %s159 = scalar_lea.vmem %s1, %s158
      $region16: #{downsample_conv.1} parent=11 // pred_fallthru
        _
      // Predicated region
      $region17: #{downsample_conv.1} parent=11 // pred_check
        %p160 = pneg %p108
      $region18: #{downsample_conv.1} parent=11 // pred_check_branch
        %162 = sbr.rel (%p160) target = $region20
      $region19: #{downsample_conv.1} parent=11 // pred_region
        %p163 = scmp.lt.s32.totalorder %s21, 0
        %s164 = scalar_select %p163, %s21, 0
        %s165 = scalar_lea.vmem %s2, %s164
      $region20: #{downsample_conv.1} parent=11 // pred_fallthru
        _
    $region12: #{downsample_conv.1} parent=5 // pred_fallthru
      _
    %p166 = scmp.lt.s32.totalorder %s9, 2
    // Predicated region
    $region21: #{downsample_conv.1} parent=5 // pred_check
      %p167 = pneg %p166
    $region22: #{downsample_conv.1} parent=5 // pred_check_branch
      %169 = sbr.rel (%p167) target = $region24
    $region23: #{downsample_conv.1} parent=5 // pred_region
      // Predicated region
      $region25: #{downsample_conv.1} parent=23 // pred_check
        %p170 = pneg %p50
      $region26: #{downsample_conv.1} parent=23 // pred_check_branch
        %172 = sbr.rel (%p170) target = $region28
      $region27: #{downsample_conv.1} parent=23 // pred_region
        %s173 = smul.u32 8, %s17
        %p174 = scmp.lt.s32.totalorder %s16, 1
        %s175 = scalar_select %p174, %s16, 1
        %p176 = scmp.lt.s32.totalorder %s173, 7
        %s177 = scalar_select %p176, %s173, 7
        %s178 = smul.addr %s175, 8
        %s179 = sadd.s32 %s177, %s178
        %s180 = smul.addr %s179, 8
        %s181 = scalar_lea.vmem %s0, %s180
        %s182 = smul.u32 8, %s17
      $region28: #{downsample_conv.1} parent=23 // pred_fallthru
        _
    $region24: #{downsample_conv.1} parent=5 // pred_fallthru
      _
    %p183 = scmp.le.s32.totalorder 1, %s9
    %p184 = scmp.lt.s32.totalorder %s9, 3
    %p185 = pnand %p183, %p184
    %p186 = pneg %p185
    // Predicated region
    $region29: #{downsample_conv.1} parent=5 // pred_check
      _
    $region30: #{downsample_conv.1} parent=5 // pred_check_branch
      %188 = sbr.rel (%p185) target = $region32
    $region31: #{downsample_conv.1} parent=5 // pred_region
      %s189 = ssub.s32 %s9, 1
      %s190 = smul.u32 8, %s20
      %p191 = scmp.lt.s32.totalorder %s19, 1
      %s192 = scalar_select %p191, %s19, 1
      %p193 = scmp.lt.s32.totalorder %s190, 7
      %s194 = scalar_select %p193, %s190, 7
      %s195 = smul.addr %s192, 8
      %s196 = sadd.s32 %s194, %s195
      %s197 = smul.addr %s196, 8
      %s198 = scalar_lea.vmem %s0, %s197
      %p199 = pneg %p56
      %p200 = pneg %p53
      %p201 = scmp.lt.s32.totalorder %s21, 0
      %s202 = scalar_select %p201, %s21, 0
      %s203 = smul.addr %s202, 8
      %s204 = scalar_lea.vmem %s1, %s203
      %p205 = pneg %p82
      %p206 = pneg %p79
      %p207 = scmp.lt.s32.totalorder %s21, 0
      %s208 = scalar_select %p207, %s21, 0
      %s209 = scalar_lea.vmem %s2, %s208
      %p210 = pneg %p108
      %p211 = pneg %p105
      %p212 = pneg %p138
      %p213 = pneg %p135
      %s214 = smul.u32 8, %s20
      %p215 = scmp.lt.s32.totalorder %s19, 1
      %s216 = scalar_select %p215, %s19, 1
      %p217 = scmp.lt.s32.totalorder %s214, 7
      %s218 = scalar_select %p217, %s214, 7
      %p219 = scmp.lt.s32.totalorder %s21, 0
      %s220 = scalar_select %p219, %s21, 0
      %s221 = sadd.s32 %s220, %s218
      %s222 = smul.addr %s216, 8
      %s223 = sadd.s32 %s221, %s222
      %s224 = smul.addr %s223, 8
      %s225 = scalar_lea.vmem %s3, %s224
      %s226 = smul.u32 8, %s20
      %p227 = scmp.lt.s32.totalorder %s19, 1
      %s228 = scalar_select %p227, %s19, 1
      %p229 = scmp.lt.s32.totalorder %s226, 7
      %s230 = scalar_select %p229, %s226, 7
      %s231 = smul.addr %s228, 8
      %s232 = sadd.s32 %s230, %s231
      %s233 = smul.addr %s232, 8
      %s234 = scalar_lea.vmem %s0, %s233
      %s235 = smul.u32 8, %s20
      %p236 = scmp.lt.s32.totalorder %s21, 0
      %s237 = scalar_select %p236, %s21, 0
      %s238 = smul.addr %s237, 8
      %s239 = scalar_lea.vmem %s1, %s238
      %p240 = scmp.lt.s32.totalorder %s21, 0
      %s241 = scalar_select %p240, %s21, 0
      %s242 = scalar_lea.vmem %s2, %s241
      %s243 = smul.u32 8, %s20
      %p244 = scmp.lt.s32.totalorder %s19, 1
      %s245 = scalar_select %p244, %s19, 1
      %p246 = scmp.lt.s32.totalorder %s243, 7
      %s247 = scalar_select %p246, %s243, 7
      %p248 = scmp.lt.s32.totalorder %s21, 0
      %s249 = scalar_select %p248, %s21, 0
      %s250 = sadd.s32 %s249, %s247
      %s251 = smul.addr %s245, 8
      %s252 = sadd.s32 %s250, %s251
      %s253 = smul.addr %s252, 8
      %s254 = scalar_lea.vmem %s3, %s253
      %s255 = smul.u32 8, %s20
      %v256 = vld [vmem:[%s234] sm:$0xff]
      %v257 = vld [vmem:[%s234 + $0x8] sm:$0xff]
      %v258 = vld [vmem:[%s234 + $0x10] sm:$0xff]
      %v259 = vld [vmem:[%s234 + $0x18] sm:$0xff]
      %v260 = vld [vmem:[%s234 + $0x20] sm:$0xff]
      %v261 = vld [vmem:[%s234 + $0x28] sm:$0xff]
      %v262 = vld [vmem:[%s234 + $0x30] sm:$0xff]
      %v263 = vld [vmem:[%s234 + $0x38] sm:$0xff]
      %v264 = vld [vmem:[%s239] sm:$0xff]
      %v265 = vld [vmem:[%s239 + $0x8] sm:$0xff]
      %v266 = vld [vmem:[%s239 + $0x10] sm:$0xff]
      %v267 = vld [vmem:[%s239 + $0x18] sm:$0xff]
      %v268 = vld [vmem:[%s239 + $0x20] sm:$0xff]
      %v269 = vld [vmem:[%s239 + $0x28] sm:$0xff]
      %v270 = vld [vmem:[%s239 + $0x30] sm:$0xff]
      %v271 = vld [vmem:[%s239 + $0x38] sm:$0xff]
      %v272 = vld [vmem:[%s239 + $0x40] sm:$0xff]
      %v273 = vld [vmem:[%s239 + $0x48] sm:$0xff]
      %v274 = vld [vmem:[%s239 + $0x50] sm:$0xff]
      %v275 = vld [vmem:[%s239 + $0x58] sm:$0xff]
      %v276 = vld [vmem:[%s239 + $0x60] sm:$0xff]
      %v277 = vld [vmem:[%s239 + $0x68] sm:$0xff]
      %v278 = vld [vmem:[%s239 + $0x70] sm:$0xff]
      %v279 = vld [vmem:[%s239 + $0x78] sm:$0xff]
      %v280 = vld [vmem:[%s242] sm:$0x1]
      %v282 = vperm.slane %v280, 0
      %284 = vmatpush.msra.mxu0 %v279
      %285 = vmatpush.msra.mxu0 %v278
      %286 = vmatpush.msra.mxu0 %v277
      %287 = vmatpush.msra.mxu0 %v276
      %288 = vmatpush.msra.mxu0 %v275
      %289 = vmatpush.msra.mxu0 %v274
      %290 = vmatpush.msra.mxu0 %v273
      %291 = vmatpush.msra.mxu0 %v272
      %292 = vmatpush.msra.mxu0 %v271
      %293 = vmatpush.msra.mxu0 %v270
      %294 = vmatpush.msra.mxu0 %v269
      %295 = vmatpush.msra.mxu0 %v268
      %296 = vmatpush.msra.mxu0 %v267
      %297 = vmatpush.msra.mxu0 %v266
      %298 = vmatpush.msra.mxu0 %v265
      %299 = vmatpush.msra.mxu0 %v264
      %300 = vmatmul.f32.gmra.mxu0 %v256
      %v301 = vpop.f32.mrf.mxu0
      %v302 = vadd.f32 %v282, %v301
      %303 = vmatmul.f32.gmra.mxu0 %v257
      %v304 = vpop.f32.mrf.mxu0
      %v305 = vadd.f32 %v282, %v304
      %306 = vmatmul.f32.gmra.mxu0 %v258
      %v307 = vpop.f32.mrf.mxu0
      %v308 = vadd.f32 %v282, %v307
      %309 = vmatmul.f32.gmra.mxu0 %v259
      %v310 = vpop.f32.mrf.mxu0
      %v311 = vadd.f32 %v282, %v310
      %312 = vmatmul.f32.gmra.mxu0 %v260
      %v313 = vpop.f32.mrf.mxu0
      %v314 = vadd.f32 %v282, %v313
      %315 = vmatmul.f32.gmra.mxu0 %v261
      %v316 = vpop.f32.mrf.mxu0
      %v317 = vadd.f32 %v282, %v316
      %318 = vmatmul.f32.gmra.mxu0 %v262
      %v319 = vpop.f32.mrf.mxu0
      %v320 = vadd.f32 %v282, %v319
      %321 = vmatmul.f32.gmra.mxu0 %v263
      %v322 = vpop.f32.mrf.mxu0
      %v323 = vadd.f32 %v282, %v322
      %324 = vdwg.mxu0
      %325 = vst [vmem:[%s254] sm:$0xff] %v302
      %326 = vst [vmem:[%s254 + $0x8] sm:$0xff] %v305
      %327 = vst [vmem:[%s254 + $0x10] sm:$0xff] %v308
      %328 = vst [vmem:[%s254 + $0x18] sm:$0xff] %v311
      %329 = vst [vmem:[%s254 + $0x20] sm:$0xff] %v314
      %330 = vst [vmem:[%s254 + $0x28] sm:$0xff] %v317
      %331 = vst [vmem:[%s254 + $0x30] sm:$0xff] %v320
      %332 = vst [vmem:[%s254 + $0x38] sm:$0xff] %v323
      %s333 = smul.u32 8, %s20
      %p334 = scmp.lt.s32.totalorder %s19, 1
      %s335 = scalar_select %p334, %s19, 1
      %p336 = scmp.lt.s32.totalorder %s333, 7
      %s337 = scalar_select %p336, %s333, 7
      %p338 = scmp.lt.s32.totalorder %s21, 0
      %s339 = scalar_select %p338, %s21, 0
      %s340 = sadd.s32 %s339, %s337
      %s341 = smul.addr %s335, 8
      %s342 = sadd.s32 %s340, %s341
      %s343 = smul.addr %s342, 8
      %s344 = scalar_lea.vmem %s3, %s343
      // Predicated region
      $region33: #{downsample_conv.1} parent=31 // pred_check
        %p345 = pneg %p135
      $region34: #{downsample_conv.1} parent=31 // pred_check_branch
        %347 = sbr.rel (%p345) target = $region36
      $region35: #{downsample_conv.1} parent=31 // pred_region
        %s348 = smul.u32 8, %s20
      $region36: #{downsample_conv.1} parent=31 // pred_fallthru
        _
    $region32: #{downsample_conv.1} parent=5 // pred_fallthru
      _
    %p349 = scmp.le.s32.totalorder 2, %s9
    // Predicated region
    $region37: #{downsample_conv.1} parent=5 // pred_check
      %p350 = pneg %p349
    $region38: #{downsample_conv.1} parent=5 // pred_check_branch
      %352 = sbr.rel (%p350) target = $region40
    $region39: #{downsample_conv.1} parent=5 // pred_region
      %s353 = ssub.s32 %s9, 2
      // Predicated region
      $region41: #{downsample_conv.1} parent=39 // pred_check
        %p354 = pneg %p141
      $region42: #{downsample_conv.1} parent=39 // pred_check_branch
        %356 = sbr.rel (%p354) target = $region44
      $region43: #{downsample_conv.1} parent=39 // pred_region
        %s357 = smul.u32 8, %s23
        %p358 = scmp.lt.s32.totalorder %s22, 1
        %s359 = scalar_select %p358, %s22, 1
        %p360 = scmp.lt.s32.totalorder %s357, 7
        %s361 = scalar_select %p360, %s357, 7
        %p362 = scmp.lt.s32.totalorder %s24, 0
        %s363 = scalar_select %p362, %s24, 0
        %s364 = sadd.s32 %s363, %s361
        %s365 = smul.addr %s359, 8
        %s366 = sadd.s32 %s364, %s365
        %s367 = smul.addr %s366, 8
        %s368 = scalar_lea.vmem %s3, %s367
      $region44: #{downsample_conv.1} parent=39 // pred_fallthru
        _
    $region40: #{downsample_conv.1} parent=5 // pred_fallthru
      _
  $region6: #{downsample_conv.1} parent=0 // loop_footer
    %s13 = sadd.s32 1, %s9
  $region7: #{downsample_conv.1} parent=0 // loop_footer_branch
    %8 = sbr.rel target = $region3
  $region8: #{downsample_conv.1} parent=0 // loop_exit
    _

</llo_original>
